<compile_context>
chip_gen: v7x
topology: tpu7x:2x2x1
jax: 0.10.0
libtpu: 0.0.40
codegen_flags: <defaults>
</compile_context>

<pallas_src>
import functools
import math

import jax
import jax.numpy as jnp
from jax import lax
from jax.experimental import pallas as pl
from jax.experimental.pallas import tpu as pltpu


# ---------------------------------------------------------------------------
# Fused kernel: one batch block per grid step.
#   x (Bb,T,C) f32 | w (C,4C)=[Wq*scale|Wk|Wv|Wproj] mxu-dtype | b (1,C) f32
#   -> o (Bb,T,C)
# ---------------------------------------------------------------------------
def _mha_fused_kernel(x_ref, w_ref, b_ref, o_ref, *, n_heads):
    b_blk, t, c = x_ref.shape
    hs = c // n_heads
    mxu_dtype = w_ref.dtype
    neg_big = jnp.float32(-1e30)

    w = w_ref[...]                               # (C, 4C), VMEM resident
    w_qkv = w[:, :3 * c]                         # (C, 3C)
    w_out = w[:, 3 * c:]                         # (C, C)

    # Fused QKV projection for the whole batch block: one wide MXU stream.
    # Scale is already folded into the Wq columns of the slab.
    x = x_ref[...].reshape(b_blk * t, c).astype(mxu_dtype)
    qkv = jnp.dot(x, w_qkv, preferred_element_type=jnp.float32)   # (Bb*T, 3C) f32

    # Causal mask + bias accumulator-init, hoisted (computed once per step).
    rows = lax.broadcasted_iota(jnp.int32, (t, t), 0)
    cols = lax.broadcasted_iota(jnp.int32, (t, t), 1)
    causal = cols <= rows
    bias_tile = jnp.broadcast_to(b_ref[...], (t, c)).astype(jnp.float32)

    for b in range(b_blk):                       # static, small by construction
        qkv_b = qkv[b * t:(b + 1) * t]           # (T, 3C) static sublane slice
        y = bias_tile                            # f32 output-proj accumulator
        for h in range(n_heads):                 # static unrolled head loop
            lo = h * hs
            qh = qkv_b[:, lo:lo + hs].astype(mxu_dtype)               # (T, hs)
            kh = qkv_b[:, c + lo:c + lo + hs].astype(mxu_dtype)
            vh = qkv_b[:, 2 * c + lo:2 * c + lo + hs].astype(mxu_dtype)

            # q k^T without an explicit transpose: contract last dims of both.
            s = lax.dot_general(qh, kh, (((1,), (1,)), ((), ())),
                                preferred_element_type=jnp.float32)   # (T, T)
            s = jnp.where(causal, s, neg_big)
            s = s - jnp.max(s, axis=-1, keepdims=True)
            p = jnp.exp(s)                                            # unnormalized
            denom = jnp.sum(p, axis=-1, keepdims=True)

            # Normalize AFTER the PV matmul (T*hs elements instead of T*T);
            # the approximate reciprocal runs on the otherwise-idle EUP slot.
            pv = jnp.dot(p.astype(mxu_dtype), vh,
                         preferred_element_type=jnp.float32)          # (T, hs)
            head_out = pv * pl.reciprocal(denom, approx=True)

            # Accumulate the output projection per head (no lane concat,
            # short live ranges): y += head_out @ Wproj[h*hs:(h+1)*hs, :].
            y = y + jnp.dot(head_out.astype(mxu_dtype), w_out[lo:lo + hs, :],
                            preferred_element_type=jnp.float32)

        # One lane-contiguous (T, C) store per batch element (never per head).
        o_ref[b] = y.astype(o_ref.dtype)


def multi_head_attention(context, wq, wk, wv, w_proj, b_proj, *,
                         batch_block=None, mxu_dtype=jnp.bfloat16):
    """context: (B,T,C); wq/wk/wv: (H,C,hs); w_proj: (C,C); b_proj: (C,)."""
    B, T, C = context.shape
    H, _, hs = wq.shape
    assert H * hs == C

    if batch_block is None:
        # As many batch rows per step as possible while keeping >= 2 grid
        # steps when B >= 2, so v7x megacore can shard on the batch axis.
        batch_block = max(1, B // 2)
    assert B % batch_block == 0
    n_blocks = B // batch_block

    # One-time parameter prep (weights only, no activation traffic):
    # head-major (C, H*hs) column packing, scale folded into Wq, all four
    # matrices packed into one lane-dense (C, 4C) slab, cast to the MXU dtype.
    scale = 1.0 / math.sqrt(hs)
    wq_all = jnp.transpose(wq, (1, 0, 2)).reshape(C, C) * scale
    wk_all = jnp.transpose(wk, (1, 0, 2)).reshape(C, C)
    wv_all = jnp.transpose(wv, (1, 0, 2)).reshape(C, C)
    w_slab = jnp.concatenate([wq_all, wk_all, wv_all, w_proj],
                             axis=1).astype(mxu_dtype)               # (C, 4C)

    kernel = functools.partial(_mha_fused_kernel, n_heads=H)

    return pl.pallas_call(
        kernel,
        out_shape=jax.ShapeDtypeStruct((B, T, C), context.dtype),
        grid=(n_blocks,),
        in_specs=[
            pl.BlockSpec((batch_block, T, C), lambda i: (i, 0, 0)),  # activations
            pl.BlockSpec((C, 4 * C), lambda i: (0, 0)),              # weight slab
            pl.BlockSpec((1, C), lambda i: (0, 0)),                  # bias (f32)
        ],
        out_specs=pl.BlockSpec((batch_block, T, C), lambda i: (i, 0, 0)),
        compiler_params=pltpu.CompilerParams(
            dimension_semantics=("parallel",),
            vmem_limit_bytes=32 * 1024 * 1024,
        ),
    )(context, w_slab, b_proj.reshape(1, C).astype(jnp.float32))


# ---------------------------------------------------------------------------
# Pure-JAX reference (mirrors the PyTorch forward) for a correctness check.
# ---------------------------------------------------------------------------
def _reference(context, wq, wk, wv, w_proj, b_proj):
    B, T, C = context.shape
    H, _, hs = wq.shape
    scale = 1.0 / jnp.sqrt(jnp.float32(hs))
    heads = []
    for h in range(H):
        q = context @ wq[h]
        k = context @ wk[h]
        v = context @ wv[h]
        s = (q @ jnp.swapaxes(k, -1, -2)) * scale
        mask = jnp.tril(jnp.ones((T, T), dtype=bool))
        s = jnp.where(mask, s, -jnp.inf)
        p = jax.nn.softmax(s, axis=-1)
        heads.append(p @ v)
    heads_cat = jnp.concatenate(heads, axis=-1)
    return heads_cat @ w_proj + b_proj


if __name__ == "__main__":
    # Small shapes consistent with the module: embed_dim=32, n_heads=4, seq=8.
    B, T, C, H = 2, 8, 32, 4
    hs = C // H

    key = jax.random.PRNGKey(0)
    kx, kq, kk, kv, kw, kb = jax.random.split(key, 6)

    context = jax.random.normal(kx, (B, T, C), dtype=jnp.float32)
    wq = jax.random.normal(kq, (H, C, hs), dtype=jnp.float32) * 0.05
    wk = jax.random.normal(kk, (H, C, hs), dtype=jnp.float32) * 0.05
    wv = jax.random.normal(kv, (H, C, hs), dtype=jnp.float32) * 0.05
    w_proj = jax.random.normal(kw, (C, C), dtype=jnp.float32) * 0.05
    b_proj = jax.random.normal(kb, (C,), dtype=jnp.float32) * 0.05

    out = multi_head_attention(context, wq, wk, wv, w_proj, b_proj)
    out = jax.block_until_ready(out)

    ref = _reference(context, wq, wk, wv, w_proj, b_proj)
    assert out.shape == (B, T, C)
    # Tolerance accounts for bf16 MXU operands (f32 accumulation) and the EUP
    # approximate reciprocal in the softmax normalization.
    assert jnp.allclose(out, ref, atol=3e-2, rtol=3e-2), "mismatch vs reference"

    print("KERNEL_OK")
</pallas_src>

<mosaic_0001>
module attributes {stable_mosaic.version = 11 : i64} {
  func.func @_mha_fused_kernel(%arg0: i32, %arg1: memref<1x8x32xf32, #tpu.memory_space<vmem>>, %arg2: memref<32x128xbf16, #tpu.memory_space<vmem>>, %arg3: memref<1x32xf32, #tpu.memory_space<vmem>>, %arg4: memref<1x8x32xf32, #tpu.memory_space<vmem>>) attributes {dimension_semantics = [#tpu.dimension_semantics<parallel>], iteration_bounds = array<i64: 2>, scalar_prefetch = 0 : i64, scratch_operands = 0 : i64, tpu.core_type = #tpu.core_type<tc>, window_params = [{transform_indices = @transform_0, window_bounds = array<i64: 1, 8, 32>}, {pipeline_mode = #tpu.pipeline_mode<synchronous>, transform_indices = @transform_1, window_bounds = array<i64: 32, 128>}, {pipeline_mode = #tpu.pipeline_mode<synchronous>, transform_indices = @transform_2, window_bounds = array<i64: 1, 32>}, {transform_indices = @transform_3, window_bounds = array<i64: 1, 8, 32>}]} {
    %c0 = arith.constant 0 : index
    %c0_0 = arith.constant 0 : index
    %0 = vector.load %arg2[%c0, %c0_0] : memref<32x128xbf16, #tpu.memory_space<vmem>>, vector<32x128xbf16>
    %1 = vector.extract_strided_slice %0 {offsets = [0, 0], sizes = [32, 96], strides = [1, 1]} : vector<32x128xbf16> to vector<32x96xbf16>
    %2 = vector.extract_strided_slice %0 {offsets = [0, 96], sizes = [32, 32], strides = [1, 1]} : vector<32x128xbf16> to vector<32x32xbf16>
    %c0_1 = arith.constant 0 : index
    %c0_2 = arith.constant 0 : index
    %c0_3 = arith.constant 0 : index
    %3 = vector.load %arg1[%c0_1, %c0_2, %c0_3] : memref<1x8x32xf32, #tpu.memory_space<vmem>>, vector<1x8x32xf32>
    %4 = vector.shape_cast %3 : vector<1x8x32xf32> to vector<8x32xf32>
    %5 = arith.truncf %4 : vector<8x32xf32> to vector<8x32xbf16>
    %cst = arith.constant dense<0.000000e+00> : vector<8x96xf32>
    %6 = tpu.matmul %5, %1, %cst {dimension_numbers = #tpu.dot_dimension_numbers<[1], [0], [0], [1], [0, 0, 1, 1], [], []>} : vector<8x32xbf16>, vector<32x96xbf16>, vector<8x96xf32> -> vector<8x96xf32>
    %7 = tpu.iota {dimensions = array<i32: 0>} : vector<8x8xi32>
    %8 = tpu.iota {dimensions = array<i32: 1>} : vector<8x8xi32>
    %9 = arith.cmpi sle, %8, %7 : vector<8x8xi32>
    %c0_4 = arith.constant 0 : index
    %c0_5 = arith.constant 0 : index
    %10 = vector.load %arg3[%c0_4, %c0_5] : memref<1x32xf32, #tpu.memory_space<vmem>>, vector<1x32xf32>
    %11 = vector.shape_cast %10 : vector<1x32xf32> to vector<1x32xf32>
    %12 = vector.broadcast %11 : vector<1x32xf32> to vector<8x32xf32>
    %13 = vector.extract_strided_slice %6 {offsets = [0, 0], sizes = [8, 8], strides = [1, 1]} : vector<8x96xf32> to vector<8x8xf32>
    %14 = arith.truncf %13 : vector<8x8xf32> to vector<8x8xbf16>
    %15 = vector.extract_strided_slice %6 {offsets = [0, 32], sizes = [8, 8], strides = [1, 1]} : vector<8x96xf32> to vector<8x8xf32>
    %16 = arith.truncf %15 : vector<8x8xf32> to vector<8x8xbf16>
    %17 = vector.extract_strided_slice %6 {offsets = [0, 64], sizes = [8, 8], strides = [1, 1]} : vector<8x96xf32> to vector<8x8xf32>
    %18 = arith.truncf %17 : vector<8x8xf32> to vector<8x8xbf16>
    %cst_6 = arith.constant dense<0.000000e+00> : vector<8x8xf32>
    %19 = tpu.matmul %14, %16, %cst_6 {dimension_numbers = #tpu.dot_dimension_numbers<[1], [1], [0], [0], [0, 0, 1, 0], [], []>} : vector<8x8xbf16>, vector<8x8xbf16>, vector<8x8xf32> -> vector<8x8xf32>
    %cst_7 = arith.constant -1.000000e+30 : f32
    %20 = vector.broadcast %cst_7 : f32 to vector<8x8xf32>
    %21 = arith.select %9, %19, %20 : vector<8x8xi1>, vector<8x8xf32>
    %cst_8 = arith.constant dense<0xFF800000> : vector<8xf32>
    %22 = vector.multi_reduction <maximumf>, %21, %cst_8 [1] : vector<8x8xf32> to vector<8xf32>
    %23 = vector.shape_cast %22 : vector<8xf32> to vector<8x1xf32>
    %24 = vector.broadcast %23 : vector<8x1xf32> to vector<8x8xf32>
    %25 = arith.subf %21, %24 : vector<8x8xf32>
    %26 = math.exp %25 : vector<8x8xf32>
    %cst_9 = arith.constant dense<0.000000e+00> : vector<8xf32>
    %27 = vector.multi_reduction <add>, %26, %cst_9 [1] : vector<8x8xf32> to vector<8xf32>
    %28 = vector.shape_cast %27 : vector<8xf32> to vector<8x1xf32>
    %29 = arith.truncf %26 : vector<8x8xf32> to vector<8x8xbf16>
    %cst_10 = arith.constant dense<0.000000e+00> : vector<8x8xf32>
    %30 = tpu.matmul %29, %18, %cst_10 {dimension_numbers = #tpu.dot_dimension_numbers<[1], [0], [0], [1], [0, 0, 1, 1], [], []>} : vector<8x8xbf16>, vector<8x8xbf16>, vector<8x8xf32> -> vector<8x8xf32>
    %31 = tpu.reciprocal %28 {approx = true} : vector<8x1xf32> -> vector<8x1xf32>
    %32 = vector.broadcast %31 : vector<8x1xf32> to vector<8x8xf32>
    %33 = arith.mulf %30, %32 : vector<8x8xf32>
    %34 = arith.truncf %33 : vector<8x8xf32> to vector<8x8xbf16>
    %35 = vector.extract_strided_slice %2 {offsets = [0, 0], sizes = [8, 32], strides = [1, 1]} : vector<32x32xbf16> to vector<8x32xbf16>
    %cst_11 = arith.constant dense<0.000000e+00> : vector<8x32xf32>
    %36 = tpu.matmul %34, %35, %cst_11 {dimension_numbers = #tpu.dot_dimension_numbers<[1], [0], [0], [1], [0, 0, 1, 1], [], []>} : vector<8x8xbf16>, vector<8x32xbf16>, vector<8x32xf32> -> vector<8x32xf32>
    %37 = arith.addf %12, %36 : vector<8x32xf32>
    %38 = vector.extract_strided_slice %6 {offsets = [0, 8], sizes = [8, 8], strides = [1, 1]} : vector<8x96xf32> to vector<8x8xf32>
    %39 = arith.truncf %38 : vector<8x8xf32> to vector<8x8xbf16>
    %40 = vector.extract_strided_slice %6 {offsets = [0, 40], sizes = [8, 8], strides = [1, 1]} : vector<8x96xf32> to vector<8x8xf32>
    %41 = arith.truncf %40 : vector<8x8xf32> to vector<8x8xbf16>
    %42 = vector.extract_strided_slice %6 {offsets = [0, 72], sizes = [8, 8], strides = [1, 1]} : vector<8x96xf32> to vector<8x8xf32>
    %43 = arith.truncf %42 : vector<8x8xf32> to vector<8x8xbf16>
    %cst_12 = arith.constant dense<0.000000e+00> : vector<8x8xf32>
    %44 = tpu.matmul %39, %41, %cst_12 {dimension_numbers = #tpu.dot_dimension_numbers<[1], [1], [0], [0], [0, 0, 1, 0], [], []>} : vector<8x8xbf16>, vector<8x8xbf16>, vector<8x8xf32> -> vector<8x8xf32>
    %cst_13 = arith.constant -1.000000e+30 : f32
    %45 = vector.broadcast %cst_13 : f32 to vector<8x8xf32>
    %46 = arith.select %9, %44, %45 : vector<8x8xi1>, vector<8x8xf32>
    %cst_14 = arith.constant dense<0xFF800000> : vector<8xf32>
    %47 = vector.multi_reduction <maximumf>, %46, %cst_14 [1] : vector<8x8xf32> to vector<8xf32>
    %48 = vector.shape_cast %47 : vector<8xf32> to vector<8x1xf32>
    %49 = vector.broadcast %48 : vector<8x1xf32> to vector<8x8xf32>
    %50 = arith.subf %46, %49 : vector<8x8xf32>
    %51 = math.exp %50 : vector<8x8xf32>
    %cst_15 = arith.constant dense<0.000000e+00> : vector<8xf32>
    %52 = vector.multi_reduction <add>, %51, %cst_15 [1] : vector<8x8xf32> to vector<8xf32>
    %53 = vector.shape_cast %52 : vector<8xf32> to vector<8x1xf32>
    %54 = arith.truncf %51 : vector<8x8xf32> to vector<8x8xbf16>
    %cst_16 = arith.constant dense<0.000000e+00> : vector<8x8xf32>
    %55 = tpu.matmul %54, %43, %cst_16 {dimension_numbers = #tpu.dot_dimension_numbers<[1], [0], [0], [1], [0, 0, 1, 1], [], []>} : vector<8x8xbf16>, vector<8x8xbf16>, vector<8x8xf32> -> vector<8x8xf32>
    %56 = tpu.reciprocal %53 {approx = true} : vector<8x1xf32> -> vector<8x1xf32>
    %57 = vector.broadcast %56 : vector<8x1xf32> to vector<8x8xf32>
    %58 = arith.mulf %55, %57 : vector<8x8xf32>
    %59 = arith.truncf %58 : vector<8x8xf32> to vector<8x8xbf16>
    %60 = vector.extract_strided_slice %2 {offsets = [8, 0], sizes = [8, 32], strides = [1, 1]} : vector<32x32xbf16> to vector<8x32xbf16>
    %cst_17 = arith.constant dense<0.000000e+00> : vector<8x32xf32>
    %61 = tpu.matmul %59, %60, %cst_17 {dimension_numbers = #tpu.dot_dimension_numbers<[1], [0], [0], [1], [0, 0, 1, 1], [], []>} : vector<8x8xbf16>, vector<8x32xbf16>, vector<8x32xf32> -> vector<8x32xf32>
    %62 = arith.addf %37, %61 : vector<8x32xf32>
    %63 = vector.extract_strided_slice %6 {offsets = [0, 16], sizes = [8, 8], strides = [1, 1]} : vector<8x96xf32> to vector<8x8xf32>
    %64 = arith.truncf %63 : vector<8x8xf32> to vector<8x8xbf16>
    %65 = vector.extract_strided_slice %6 {offsets = [0, 48], sizes = [8, 8], strides = [1, 1]} : vector<8x96xf32> to vector<8x8xf32>
    %66 = arith.truncf %65 : vector<8x8xf32> to vector<8x8xbf16>
    %67 = vector.extract_strided_slice %6 {offsets = [0, 80], sizes = [8, 8], strides = [1, 1]} : vector<8x96xf32> to vector<8x8xf32>
    %68 = arith.truncf %67 : vector<8x8xf32> to vector<8x8xbf16>
    %cst_18 = arith.constant dense<0.000000e+00> : vector<8x8xf32>
    %69 = tpu.matmul %64, %66, %cst_18 {dimension_numbers = #tpu.dot_dimension_numbers<[1], [1], [0], [0], [0, 0, 1, 0], [], []>} : vector<8x8xbf16>, vector<8x8xbf16>, vector<8x8xf32> -> vector<8x8xf32>
    %cst_19 = arith.constant -1.000000e+30 : f32
    %70 = vector.broadcast %cst_19 : f32 to vector<8x8xf32>
    %71 = arith.select %9, %69, %70 : vector<8x8xi1>, vector<8x8xf32>
    %cst_20 = arith.constant dense<0xFF800000> : vector<8xf32>
    %72 = vector.multi_reduction <maximumf>, %71, %cst_20 [1] : vector<8x8xf32> to vector<8xf32>
    %73 = vector.shape_cast %72 : vector<8xf32> to vector<8x1xf32>
    %74 = vector.broadcast %73 : vector<8x1xf32> to vector<8x8xf32>
    %75 = arith.subf %71, %74 : vector<8x8xf32>
    %76 = math.exp %75 : vector<8x8xf32>
    %cst_21 = arith.constant dense<0.000000e+00> : vector<8xf32>
    %77 = vector.multi_reduction <add>, %76, %cst_21 [1] : vector<8x8xf32> to vector<8xf32>
    %78 = vector.shape_cast %77 : vector<8xf32> to vector<8x1xf32>
    %79 = arith.truncf %76 : vector<8x8xf32> to vector<8x8xbf16>
    %cst_22 = arith.constant dense<0.000000e+00> : vector<8x8xf32>
    %80 = tpu.matmul %79, %68, %cst_22 {dimension_numbers = #tpu.dot_dimension_numbers<[1], [0], [0], [1], [0, 0, 1, 1], [], []>} : vector<8x8xbf16>, vector<8x8xbf16>, vector<8x8xf32> -> vector<8x8xf32>
    %81 = tpu.reciprocal %78 {approx = true} : vector<8x1xf32> -> vector<8x1xf32>
    %82 = vector.broadcast %81 : vector<8x1xf32> to vector<8x8xf32>
    %83 = arith.mulf %80, %82 : vector<8x8xf32>
    %84 = arith.truncf %83 : vector<8x8xf32> to vector<8x8xbf16>
    %85 = vector.extract_strided_slice %2 {offsets = [16, 0], sizes = [8, 32], strides = [1, 1]} : vector<32x32xbf16> to vector<8x32xbf16>
    %cst_23 = arith.constant dense<0.000000e+00> : vector<8x32xf32>
    %86 = tpu.matmul %84, %85, %cst_23 {dimension_numbers = #tpu.dot_dimension_numbers<[1], [0], [0], [1], [0, 0, 1, 1], [], []>} : vector<8x8xbf16>, vector<8x32xbf16>, vector<8x32xf32> -> vector<8x32xf32>
    %87 = arith.addf %62, %86 : vector<8x32xf32>
    %88 = vector.extract_strided_slice %6 {offsets = [0, 24], sizes = [8, 8], strides = [1, 1]} : vector<8x96xf32> to vector<8x8xf32>
    %89 = arith.truncf %88 : vector<8x8xf32> to vector<8x8xbf16>
    %90 = vector.extract_strided_slice %6 {offsets = [0, 56], sizes = [8, 8], strides = [1, 1]} : vector<8x96xf32> to vector<8x8xf32>
    %91 = arith.truncf %90 : vector<8x8xf32> to vector<8x8xbf16>
    %92 = vector.extract_strided_slice %6 {offsets = [0, 88], sizes = [8, 8], strides = [1, 1]} : vector<8x96xf32> to vector<8x8xf32>
    %93 = arith.truncf %92 : vector<8x8xf32> to vector<8x8xbf16>
    %cst_24 = arith.constant dense<0.000000e+00> : vector<8x8xf32>
    %94 = tpu.matmul %89, %91, %cst_24 {dimension_numbers = #tpu.dot_dimension_numbers<[1], [1], [0], [0], [0, 0, 1, 0], [], []>} : vector<8x8xbf16>, vector<8x8xbf16>, vector<8x8xf32> -> vector<8x8xf32>
    %cst_25 = arith.constant -1.000000e+30 : f32
    %95 = vector.broadcast %cst_25 : f32 to vector<8x8xf32>
    %96 = arith.select %9, %94, %95 : vector<8x8xi1>, vector<8x8xf32>
    %cst_26 = arith.constant dense<0xFF800000> : vector<8xf32>
    %97 = vector.multi_reduction <maximumf>, %96, %cst_26 [1] : vector<8x8xf32> to vector<8xf32>
    %98 = vector.shape_cast %97 : vector<8xf32> to vector<8x1xf32>
    %99 = vector.broadcast %98 : vector<8x1xf32> to vector<8x8xf32>
    %100 = arith.subf %96, %99 : vector<8x8xf32>
    %101 = math.exp %100 : vector<8x8xf32>
    %cst_27 = arith.constant dense<0.000000e+00> : vector<8xf32>
    %102 = vector.multi_reduction <add>, %101, %cst_27 [1] : vector<8x8xf32> to vector<8xf32>
    %103 = vector.shape_cast %102 : vector<8xf32> to vector<8x1xf32>
    %104 = arith.truncf %101 : vector<8x8xf32> to vector<8x8xbf16>
    %cst_28 = arith.constant dense<0.000000e+00> : vector<8x8xf32>
    %105 = tpu.matmul %104, %93, %cst_28 {dimension_numbers = #tpu.dot_dimension_numbers<[1], [0], [0], [1], [0, 0, 1, 1], [], []>} : vector<8x8xbf16>, vector<8x8xbf16>, vector<8x8xf32> -> vector<8x8xf32>
    %106 = tpu.reciprocal %103 {approx = true} : vector<8x1xf32> -> vector<8x1xf32>
    %107 = vector.broadcast %106 : vector<8x1xf32> to vector<8x8xf32>
    %108 = arith.mulf %105, %107 : vector<8x8xf32>
    %109 = arith.truncf %108 : vector<8x8xf32> to vector<8x8xbf16>
    %110 = vector.extract_strided_slice %2 {offsets = [24, 0], sizes = [8, 32], strides = [1, 1]} : vector<32x32xbf16> to vector<8x32xbf16>
    %cst_29 = arith.constant dense<0.000000e+00> : vector<8x32xf32>
    %111 = tpu.matmul %109, %110, %cst_29 {dimension_numbers = #tpu.dot_dimension_numbers<[1], [0], [0], [1], [0, 0, 1, 1], [], []>} : vector<8x8xbf16>, vector<8x32xbf16>, vector<8x32xf32> -> vector<8x32xf32>
    %112 = arith.addf %87, %111 : vector<8x32xf32>
    %c0_30 = arith.constant 0 : index
    %c0_31 = arith.constant 0 : index
    %c0_32 = arith.constant 0 : index
    %113 = vector.load %arg4[%c0_30, %c0_31, %c0_32] : memref<1x8x32xf32, #tpu.memory_space<vmem>>, vector<1x8x32xf32>
    %114 = vector.shape_cast %113 : vector<1x8x32xf32> to vector<8x32xf32>
    %115 = vector.shape_cast %112 : vector<8x32xf32> to vector<1x8x32xf32>
    tpu.vector_store %arg4[%c0_30, %c0_31, %c0_32], %115 {strides = array<i32>} : memref<1x8x32xf32, #tpu.memory_space<vmem>>, vector<1x8x32xf32>,
    return
  }
  func.func @transform_0(%arg0: i32) -> (i32, i32, i32) {
    %c0_i32 = arith.constant 0 : i32
    %c0_i32_0 = arith.constant 0 : i32
    %c0_i32_1 = arith.constant 0 : i32
    return %arg0, %c0_i32, %c0_i32_0 : i32, i32, i32
  }
  func.func @transform_1(%arg0: i32) -> (i32, i32) {
    %c0_i32 = arith.constant 0 : i32
    %c0_i32_0 = arith.constant 0 : i32
    %c0_i32_1 = arith.constant 0 : i32
    return %c0_i32, %c0_i32_0 : i32, i32
  }
  func.func @transform_2(%arg0: i32) -> (i32, i32) {
    %c0_i32 = arith.constant 0 : i32
    %c0_i32_0 = arith.constant 0 : i32
    %c0_i32_1 = arith.constant 0 : i32
    return %c0_i32, %c0_i32_0 : i32, i32
  }
  func.func @transform_3(%arg0: i32) -> (i32, i32, i32) {
    %c0_i32 = arith.constant 0 : i32
    %c0_i32_0 = arith.constant 0 : i32
    %c0_i32_1 = arith.constant 0 : i32
    return %arg0, %c0_i32, %c0_i32_0 : i32, i32, i32
  }
}

</mosaic_0001>

<llo_original>
// kernel: tpu_custom_call.1
$region0: #{tpu_custom_call.1}
  #allocation0 [shape = 'u32[]', space=smem, size = 0x4, offset = 0x4, fixed_abs, tag = 'smem constant byte address 0x4 - core index']
  #allocation1 [shape = 'u32[144,128]{1,0:T(1,128)}', space=vmem, size = 0x12000, scoped, tag = 'internal scratch']
  %s0 = inlined_call_operand.hbm [shape: f32[2,8,32], index: 0, kind: input, shape index: {}]
  %s1 = inlined_call_operand.hbm [shape: bf16[32,128], index: 1, kind: input, shape index: {}]
  %s2 = inlined_call_operand.vmem [shape: f32[1,32], index: 2, kind: input, shape index: {}]
  %s3 = inlined_call_operand.hbm [shape: f32[2,8,32], index: 3, kind: output, shape index: {}]
  %s4 = sld [smem:[#allocation0]]
  $region53: #{tpu_custom_call.1} parent=0
    _
  %s6 = ssub.s32 1, %s4
  %s7 = scalar_select 0, %s6, %s4
  $region1: #{tpu_custom_call.1} parent=0
    #allocation2 [shape = 'u8[8192]{0}', space=vmem, size = 0x2000, scoped, tag = 'input window, operand 0']
    #allocation3 [shape = 's32[2]{0}', space=sflag, size = 0x8, scoped, tag = 'scoped memory for tpu_custom_call.1']
    #allocation4 [shape = 's32[2]{0}', space=sflag, size = 0x8, scoped, tag = 'scoped memory for tpu_custom_call.1']
    #allocation5 [shape = 'u8[8192]{0}', space=vmem, size = 0x2000, scoped, tag = 'input window, operand 1, single buffered']
    #allocation6 [shape = 's32[1]{0}', space=sflag, size = 0x4, scoped, tag = 'scoped memory for tpu_custom_call.1']
    #allocation7 [shape = 'u8[8192]{0}', space=vmem, size = 0x2000, scoped, tag = 'output window, operand 0']
    %8 = vsyncpa [#allocation3], 0
    %s9 = scalar_lea.sflag [#allocation3], 1
    %10 = vsyncpa %s9, 0
    %11 = vsyncpa [#allocation6], 0
    %12 = vsyncpa [#allocation4], 0
    %s13 = scalar_lea.sflag [#allocation4], 1
    %14 = vsyncpa %s13, 0
    loop: start=0, step=1, limit=4
    $region2: #{tpu_custom_call.1} parent=1 // loop_pre_header
      _
    $region3: #{tpu_custom_call.1} parent=1 // loop_header
      %s16 = sphi 0, %s20
      %p17 = scmp.ge.s32.totalorder %s16, 4
      %s26 = sphi 0, %s28
      %s29 = sphi 0, %s26
      %s30 = sphi 0, %s29
      %s46 = sphi 0, %s30
      %s50 = sphi 0, %s50
      %s52 = sphi 0, %s50
      %s53 = sphi 0, %s52
      %s67 = sphi 0, %s53
      %s71 = sphi 0, %s71
      %s73 = sphi 0, %s71
      %s74 = sphi 0, %s73
      %s88 = sphi 0, %s74
      %s94 = sphi 0, %s96
      %s97 = sphi 0, %s94
      %s98 = sphi 0, %s97
      %s114 = sphi 0, %s98
    $region4: #{tpu_custom_call.1} parent=1 // loop_header_branch
      %19 = sbr.rel (%p17) target = $region8
    $region5: #{tpu_custom_call.1} parent=1 // loop_body
      %s21 = ssub.s32 %s16, 1
      %s22 = ssub.s32 %s16, 2
      %s23 = sadd.s32 %s16, 1
      %s24 = ssub.s32 %s16, %s23
      %p25 = scmp.eq.s32.totalorder %s24, 0
      %s27 = sadd.s32 %s26, 1
      %s28 = scalar_select %p25, %s26, %s27
      %p31 = pneg %p25
      %p32 = scmp.eq.s32.totalorder %s16, 1
      %p33 = por %p31, %p32
      %p34 = scmp.ne.s32.totalorder %s26, %s29
      %p35 = scmp.eq.s32.totalorder %s16, 0
      %p36 = por %p34, %p35
      %p37 = scmp.ne.s32.totalorder %s26, %s29
      %p38 = scmp.eq.s32.totalorder %s21, 1
      %p39 = por %p37, %p38
      %p40 = scmp.ne.s32.totalorder %s29, %s30
      %p41 = scmp.eq.s32.totalorder %s21, 0
      %p42 = por %p40, %p41
      %p43 = scmp.ne.s32.totalorder %s29, %s30
      %p44 = scmp.eq.s32.totalorder %s22, 1
      %p45 = por %p43, %p44
      %p47 = scmp.ne.s32.totalorder %s30, %s46
      %p48 = scmp.eq.s32.totalorder %s22, 0
      %p49 = por %p47, %p48
      %s51 = sadd.s32 %s50, 1
      %p54 = scmp.eq.s32.totalorder %s16, 1
      %p55 = scmp.ne.s32.totalorder %s50, %s52
      %p56 = scmp.eq.s32.totalorder %s16, 0
      %p57 = por %p55, %p56
      %p58 = scmp.ne.s32.totalorder %s50, %s52
      %p59 = scmp.eq.s32.totalorder %s21, 1
      %p60 = por %p58, %p59
      %p61 = scmp.ne.s32.totalorder %s52, %s53
      %p62 = scmp.eq.s32.totalorder %s21, 0
      %p63 = por %p61, %p62
      %p64 = scmp.ne.s32.totalorder %s52, %s53
      %p65 = scmp.eq.s32.totalorder %s22, 1
      %p66 = por %p64, %p65
      %p68 = scmp.ne.s32.totalorder %s53, %s67
      %p69 = scmp.eq.s32.totalorder %s22, 0
      %p70 = por %p68, %p69
      %s72 = sadd.s32 %s71, 1
      %p75 = scmp.eq.s32.totalorder %s16, 1
      %p76 = scmp.ne.s32.totalorder %s71, %s73
      %p77 = scmp.eq.s32.totalorder %s16, 0
      %p78 = por %p76, %p77
      %p79 = scmp.ne.s32.totalorder %s71, %s73
      %p80 = scmp.eq.s32.totalorder %s21, 1
      %p81 = por %p79, %p80
      %p82 = scmp.ne.s32.totalorder %s73, %s74
      %p83 = scmp.eq.s32.totalorder %s21, 0
      %p84 = por %p82, %p83
      %p85 = scmp.ne.s32.totalorder %s73, %s74
      %p86 = scmp.eq.s32.totalorder %s22, 1
      %p87 = por %p85, %p86
      %p89 = scmp.ne.s32.totalorder %s74, %s88
      %p90 = scmp.eq.s32.totalorder %s22, 0
      %p91 = por %p89, %p90
      %s92 = ssub.s32 %s16, %s23
      %p93 = scmp.eq.s32.totalorder %s92, 0
      %s95 = sadd.s32 %s94, 1
      %s96 = scalar_select %p93, %s94, %s95
      %p99 = pneg %p93
      %p100 = scmp.eq.s32.totalorder %s16, 1
      %p101 = por %p99, %p100
      %p102 = scmp.ne.s32.totalorder %s94, %s97
      %p103 = scmp.eq.s32.totalorder %s16, 0
      %p104 = por %p102, %p103
      %p105 = scmp.ne.s32.totalorder %s94, %s97
      %p106 = scmp.eq.s32.totalorder %s21, 1
      %p107 = por %p105, %p106
      %p108 = scmp.ne.s32.totalorder %s97, %s98
      %p109 = scmp.eq.s32.totalorder %s21, 0
      %p110 = por %p108, %p109
      %p111 = scmp.ne.s32.totalorder %s97, %s98
      %p112 = scmp.eq.s32.totalorder %s22, 1
      %p113 = por %p111, %p112
      %p115 = scmp.ne.s32.totalorder %s98, %s114
      %p116 = scmp.eq.s32.totalorder %s22, 0
      %p117 = por %p115, %p116
      %p118 = scmp.le.s32.totalorder 1, %s16
      %p119 = scmp.lt.s32.totalorder %s16, 3
      %p120 = pnand %p118, %p119
      %p121 = pneg %p120
      // Predicated region
      $region9: #{tpu_custom_call.1} parent=5 // pred_check
        _
      $region10: #{tpu_custom_call.1} parent=5 // pred_check_branch
        %123 = sbr.rel (%p120) target = $region12
      $region11: #{tpu_custom_call.1} parent=5 // pred_region
        %s124 = ssub.s32 %s16, 1
        // Predicated region
        $region13: #{tpu_custom_call.1} parent=11 // pred_check
          %p125 = pneg %p63
        $region14: #{tpu_custom_call.1} parent=11 // pred_check_branch
          %127 = sbr.rel (%p125) target = $region16
        $region15: #{tpu_custom_call.1} parent=11 // pred_region
          %s129 = ssub.s32 256, 256
          %130 = vsyncadd [#allocation6], %s129
          %s131 = sshll.u32 [#allocation5], 4
          %s132 = int_to_ptr.vmem [resolvable:$true] %s131
          %137 = dma.hbm_to_vmem [thread:$0]  %s1, 256, %s132, [#allocation6], 64, 64, 4
        $region16: #{tpu_custom_call.1} parent=11 // pred_fallthru
          _
        // Predicated region
        $region17: #{tpu_custom_call.1} parent=11 // pred_check
          %p138 = pneg %p84
        $region18: #{tpu_custom_call.1} parent=11 // pred_check_branch
          %140 = sbr.rel (%p138) target = $region20
        $region19: #{tpu_custom_call.1} parent=11 // pred_region
          _
        $region20: #{tpu_custom_call.1} parent=11 // pred_fallthru
          _
      $region12: #{tpu_custom_call.1} parent=5 // pred_fallthru
        _
      %p141 = scmp.lt.s32.totalorder %s16, 2
      // Predicated region
      $region21: #{tpu_custom_call.1} parent=5 // pred_check
        %p142 = pneg %p141
      $region22: #{tpu_custom_call.1} parent=5 // pred_check_branch
        %144 = sbr.rel (%p142) target = $region24
      $region23: #{tpu_custom_call.1} parent=5 // pred_region
        // Predicated region
        $region25: #{tpu_custom_call.1} parent=23 // pred_check
          %p145 = pneg %p36
        $region26: #{tpu_custom_call.1} parent=23 // pred_check_branch
          %147 = sbr.rel (%p145) target = $region28
        $region27: #{tpu_custom_call.1} parent=23 // pred_region
          %s148 = sand.u32 %s26, 1
          %s149 = scalar_lea.sflag [#allocation3], %s148
          %s150 = sand.u32 %s26, 1
          %s151 = smul.addr %s150, 8
          %s152 = scalar_lea.vmem [#allocation2], %s151
          %s154 = ssub.s32 128, 128
          %155 = vsyncadd %s149, %s154
          %s156 = smul.addr %s16, 128
          %s157 = scalar_lea.hbm %s0, %s156
          %s159 = sshll.u32 %s152, 4
          %s160 = int_to_ptr.vmem [resolvable:$true] %s159
          %162 = dma.hbm_to_vmem [thread:$0]  %s157, 128, %s160, %s149
        $region28: #{tpu_custom_call.1} parent=23 // pred_fallthru
          _
      $region24: #{tpu_custom_call.1} parent=5 // pred_fallthru
        _
      %p163 = scmp.le.s32.totalorder 1, %s16
      %p164 = scmp.lt.s32.totalorder %s16, 3
      %p165 = pnand %p163, %p164
      %p166 = pneg %p165
      // Predicated region
      $region29: #{tpu_custom_call.1} parent=5 // pred_check
        _
      $region30: #{tpu_custom_call.1} parent=5 // pred_check_branch
        %168 = sbr.rel (%p165) target = $region32
      $region31: #{tpu_custom_call.1} parent=5 // pred_region
        %s169 = ssub.s32 %s16, 1
        %s170 = sand.u32 %s29, 1
        %s171 = scalar_lea.sflag [#allocation3], %s170
        %s172 = sand.u32 %s29, 1
        %s173 = smul.addr %s172, 8
        %s174 = scalar_lea.vmem [#allocation2], %s173
        // Predicated region
        $region33: #{tpu_custom_call.1} parent=31 // pred_check
          %p175 = pneg %p42
        $region34: #{tpu_custom_call.1} parent=31 // pred_check_branch
          %177 = sbr.rel (%p175) target = $region36
        $region35: #{tpu_custom_call.1} parent=31 // pred_region
          %178 = dma.done %s171, 128
        $region36: #{tpu_custom_call.1} parent=31 // pred_fallthru
          _
        // Predicated region
        $region37: #{tpu_custom_call.1} parent=31 // pred_check
          %p179 = pneg %p63
        $region38: #{tpu_custom_call.1} parent=31 // pred_check_branch
          %181 = sbr.rel (%p179) target = $region40
        $region39: #{tpu_custom_call.1} parent=31 // pred_region
          %182 = dma.done [#allocation6], 256
        $region40: #{tpu_custom_call.1} parent=31 // pred_fallthru
          _
        %s183 = sand.u32 %s29, 1
        %s184 = scalar_lea.sflag [#allocation3], %s183
        %s185 = sand.u32 %s29, 1
        %s186 = smul.addr %s185, 8
        %s187 = scalar_lea.vmem [#allocation2], %s186
        %p188 = pneg %p42
        %p189 = pneg %p39
        %p190 = pneg %p63
        %p191 = pneg %p60
        %p192 = pneg %p84
        %p193 = pneg %p81
        %p194 = pneg %p110
        %p195 = pneg %p107
        %s196 = sand.u32 %s97, 1
        %s197 = scalar_lea.sflag [#allocation4], %s196
        %s198 = sand.u32 %s97, 1
        %s199 = smul.addr %s198, 8
        %s200 = scalar_lea.vmem [#allocation7], %s199
        %v202 = vld [vmem:[#allocation5] sm:$0xf]
        %v203 = vld [vmem:[#allocation5 + $0x4] sm:$0xf]
        %v204 = vld [vmem:[#allocation5 + $0x8] sm:$0xf]
        %v205 = vld [vmem:[#allocation5 + $0xc] sm:$0xf]
        %v206 = vld [vmem:[%s174] sm:$0xff]
        %v207 = vpack.c.bf16 %v206, %v206
        %v212 = vunpack.c.l.b16 %v202
        %v213 = vunpack.c.l.b16 %v203
        %v214 = vunpack.c.l.b16 %v204
        %v215 = vunpack.c.l.b16 %v205
        %v216 = vpack.c.b16 %v213, %v212
        %v217 = vpack.c.b16 %v215, %v214
        %vm220 = vcmask 261120
        %v222 = vsel %vm220, %v207, 0
        %224 = vmatprep.subr.bf16.mxu0 0
        %225 = vmatpush1.bf16.msra.mxu0 %v216
        %226 = vmatprep.subr.bf16.mxu0 0
        %227 = vmatpush1.bf16.msra.mxu0 %v217
        %228 = vmatprep.subr.bf16.mxu0 0
        %229 = vmatpush1.bf16.msra.mxu0 0
        %230 = vmatprep.subr.bf16.mxu0 0
        %231 = vmatpush1.bf16.msra.mxu0 0
        %232 = vmatprep.subr.bf16.mxu0 0
        %233 = vmatpush1.bf16.msra.mxu0 0
        %234 = vmatprep.subr.bf16.mxu0 0
        %235 = vmatpush1.bf16.msra.mxu0 0
        %236 = vmatprep.subr.bf16.mxu0 0
        %237 = vmatpush1.bf16.msra.mxu0 0
        %238 = vmatprep.subr.bf16.mxu0 0
        %239 = vmatpush1.bf16.msra.mxu0 0
        %240 = vmatprep.subr.bf16.mxu0 0
        %241 = vmatpush1.bf16.msra.mxu0 0
        %242 = vmatprep.subr.bf16.mxu0 0
        %243 = vmatpush1.bf16.msra.mxu0 0
        %244 = vmatprep.subr.bf16.mxu0 0
        %245 = vmatpush1.bf16.msra.mxu0 0
        %246 = vmatprep.subr.bf16.mxu0 0
        %247 = vmatpush1.bf16.msra.mxu0 0
        %248 = vmatprep.subr.bf16.mxu0 0
        %249 = vmatpush1.bf16.msra.mxu0 0
        %250 = vmatprep.subr.bf16.mxu0 0
        %251 = vmatpush1.bf16.msra.mxu0 0
        %252 = vmatprep.subr.bf16.mxu0 0
        %253 = vmatpush1.bf16.msra.mxu0 0
        %254 = vmatprep.subr.bf16.mxu0 0
        %255 = vmatpush1.bf16.msra.mxu0 0
        %256 = vmatprep.mubr.bf16.mxu0 0
        %257 = vmatmul.mubr.bf16.gmra.mrb[0].mxu0 %v222
        %v258 = vpop.f32.mrb[0].mxu0
        %v259 = vadd.f32 0.0, %v258
        %v260 = vpop.f32.mrb[0].mxu0
        %v261 = vpop.f32.mrb[0].mxu0
        %v262 = vpop.f32.mrb[0].mxu0
        %263 = vdwg.mxu0
        %v264 = vlaneseq
        %v265 = vshrl.u32 %v264, 7
        %v266 = vlaneseq
        %v267 = vand.u32 %v266, 127
        %vm268 = vcmp.le.s32.totalorder %v267, %v265
        %v269 = vld [vmem:[%s2] sm:$0x1]
        %v271 = vlaneseq
        %v272 = vshrl.u32 %v271, 7
        %v273 = vsub.s32 0, %v272
        %v274 = vrot.slane %v269, %v273
        %v276 = vpack.c.bf16 %v259, %v259
        %278 = vrot.lane.b32.xlu0 %v276, 96
        %v279 = vpop.permute.xlu0 %278
        %vm280 = vcmask 64512
        %v282 = vsel %vm280, %v276, 0
        %v285 = vsel %vm280, %v279, 0
        %287 = vmatprep.subr.bf16.mxu0 0
        %288 = vmatpush1.bf16.xpose.msra.mxu0 %v285
        %289 = vmatprep.subr.bf16.mxu0 0
        %290 = vmatpush1.bf16.xpose.msra.mxu0 0
        %291 = vmatprep.subr.bf16.mxu0 0
        %292 = vmatpush1.bf16.xpose.msra.mxu0 0
        %293 = vmatprep.subr.bf16.mxu0 0
        %294 = vmatpush1.bf16.xpose.msra.mxu0 0
        %295 = vmatprep.subr.bf16.mxu0 0
        %296 = vmatpush1.bf16.xpose.msra.mxu0 0
        %297 = vmatprep.subr.bf16.mxu0 0
        %298 = vmatpush1.bf16.xpose.msra.mxu0 0
        %299 = vmatprep.subr.bf16.mxu0 0
        %300 = vmatpush1.bf16.xpose.msra.mxu0 0
        %301 = vmatprep.subr.bf16.mxu0 0
        %302 = vmatpush1.bf16.xpose.msra.mxu0 0
        %303 = vmatprep.subr.bf16.mxu0 0
        %304 = vmatpush1.bf16.xpose.msra.mxu0 0
        %305 = vmatprep.subr.bf16.mxu0 0
        %306 = vmatpush1.bf16.xpose.msra.mxu0 0
        %307 = vmatprep.subr.bf16.mxu0 0
        %308 = vmatpush1.bf16.xpose.msra.mxu0 0
        %309 = vmatprep.subr.bf16.mxu0 0
        %310 = vmatpush1.bf16.xpose.msra.mxu0 0
        %311 = vmatprep.subr.bf16.mxu0 0
        %312 = vmatpush1.bf16.xpose.msra.mxu0 0
        %313 = vmatprep.subr.bf16.mxu0 0
        %314 = vmatpush1.bf16.xpose.msra.mxu0 0
        %315 = vmatprep.subr.bf16.mxu0 0
        %316 = vmatpush1.bf16.xpose.msra.mxu0 0
        %317 = vmatprep.subr.bf16.mxu0 0
        %318 = vmatpush1.bf16.xpose.msra.mxu0 0
        %319 = vmatprep.mubr.bf16.mxu0 0
        %320 = vmatmul.mubr.bf16.gmra.mrb[0].mxu0 %v282
        %v321 = vpop.f32.mrb[0].mxu0
        %v322 = vadd.f32 0.0, %v321
        %v323 = vpop.f32.mrb[0].mxu0
        %v324 = vpop.f32.mrb[0].mxu0
        %v325 = vpop.f32.mrb[0].mxu0
        %326 = vdwg.mxu0
        %v327 = vsel %vm268, %v322, -1e+30
        %v328 = vsel %vm280, %v327, -inf
        %329 = vmax.xlane.f32.xlu0 %v328
        %v330 = vpop.xlane.xlu0 %329
        %v331 = vsub.f32 %v327, %v330
        %v332 = vmul.f32 %v331, 1.442695
        %v333 = vpow.pop %v332
        %v334 = vsel %vm280, %v333, 0.0
        %335 = vadd.xlane.f32.xlu0 %v334
        %v336 = vpop.xlane.xlu0 %335
        %v337 = vpack.c.bf16 %v333, %v333
        %338 = vrot.lane.b32.xlu0 %v276, 64
        %v339 = vpop.permute.xlu0 %338
        %v341 = vsel %vm280, %v337, 0
        %vm343 = vcmask 1043456
        %v345 = vsel %vm343, %v339, 0
        %347 = vmatprep.subr.bf16.mxu0 0
        %348 = vmatpush1.bf16.msra.mxu0 %v345
        %349 = vmatprep.subr.bf16.mxu0 0
        %350 = vmatpush1.bf16.msra.mxu0 0
        %351 = vmatprep.subr.bf16.mxu0 0
        %352 = vmatpush1.bf16.msra.mxu0 0
        %353 = vmatprep.subr.bf16.mxu0 0
        %354 = vmatpush1.bf16.msra.mxu0 0
        %355 = vmatprep.subr.bf16.mxu0 0
        %356 = vmatpush1.bf16.msra.mxu0 0
        %357 = vmatprep.subr.bf16.mxu0 0
        %358 = vmatpush1.bf16.msra.mxu0 0
        %359 = vmatprep.subr.bf16.mxu0 0
        %360 = vmatpush1.bf16.msra.mxu0 0
        %361 = vmatprep.subr.bf16.mxu0 0
        %362 = vmatpush1.bf16.msra.mxu0 0
        %363 = vmatprep.subr.bf16.mxu0 0
        %364 = vmatpush1.bf16.msra.mxu0 0
        %365 = vmatprep.subr.bf16.mxu0 0
        %366 = vmatpush1.bf16.msra.mxu0 0
        %367 = vmatprep.subr.bf16.mxu0 0
        %368 = vmatpush1.bf16.msra.mxu0 0
        %369 = vmatprep.subr.bf16.mxu0 0
        %370 = vmatpush1.bf16.msra.mxu0 0
        %371 = vmatprep.subr.bf16.mxu0 0
        %372 = vmatpush1.bf16.msra.mxu0 0
        %373 = vmatprep.subr.bf16.mxu0 0
        %374 = vmatpush1.bf16.msra.mxu0 0
        %375 = vmatprep.subr.bf16.mxu0 0
        %376 = vmatpush1.bf16.msra.mxu0 0
        %377 = vmatprep.subr.bf16.mxu0 0
        %378 = vmatpush1.bf16.msra.mxu0 0
        %379 = vmatprep.mubr.bf16.mxu0 0
        %380 = vmatmul.mubr.bf16.gmra.mrb[0].mxu0 %v341
        %v381 = vpop.f32.mrb[0].mxu0
        %v382 = vadd.f32 0.0, %v381
        %v383 = vpop.f32.mrb[0].mxu0
        %v384 = vpop.f32.mrb[0].mxu0
        %v385 = vpop.f32.mrb[0].mxu0
        %386 = vdwg.mxu0
        %v387 = vrcp.pop %v336
        %v388 = vmul.f32 %v382, %v387
        %v389 = vpack.c.bf16 %v388, %v388
        %v390 = vpack.c.b16 %v212, %v212
        %391 = vrot.lane.b32.xlu0 %v390, 32
        %v392 = vpop.permute.xlu0 %391
        %v394 = vsel %vm280, %v389, 0
        %v397 = vsel %vm343, %v392, 0
        %399 = vmatprep.subr.bf16.mxu0 0
        %400 = vmatpush1.bf16.msra.mxu0 %v397
        %401 = vmatprep.subr.bf16.mxu0 0
        %402 = vmatpush1.bf16.msra.mxu0 0
        %403 = vmatprep.subr.bf16.mxu0 0
        %404 = vmatpush1.bf16.msra.mxu0 0
        %405 = vmatprep.subr.bf16.mxu0 0
        %406 = vmatpush1.bf16.msra.mxu0 0
        %407 = vmatprep.subr.bf16.mxu0 0
        %408 = vmatpush1.bf16.msra.mxu0 0
        %409 = vmatprep.subr.bf16.mxu0 0
        %410 = vmatpush1.bf16.msra.mxu0 0
        %411 = vmatprep.subr.bf16.mxu0 0
        %412 = vmatpush1.bf16.msra.mxu0 0
        %413 = vmatprep.subr.bf16.mxu0 0
        %414 = vmatpush1.bf16.msra.mxu0 0
        %415 = vmatprep.subr.bf16.mxu0 0
        %416 = vmatpush1.bf16.msra.mxu0 0
        %417 = vmatprep.subr.bf16.mxu0 0
        %418 = vmatpush1.bf16.msra.mxu0 0
        %419 = vmatprep.subr.bf16.mxu0 0
        %420 = vmatpush1.bf16.msra.mxu0 0
        %421 = vmatprep.subr.bf16.mxu0 0
        %422 = vmatpush1.bf16.msra.mxu0 0
        %423 = vmatprep.subr.bf16.mxu0 0
        %424 = vmatpush1.bf16.msra.mxu0 0
        %425 = vmatprep.subr.bf16.mxu0 0
        %426 = vmatpush1.bf16.msra.mxu0 0
        %427 = vmatprep.subr.bf16.mxu0 0
        %428 = vmatpush1.bf16.msra.mxu0 0
        %429 = vmatprep.subr.bf16.mxu0 0
        %430 = vmatpush1.bf16.msra.mxu0 0
        %431 = vmatprep.mubr.bf16.mxu0 0
        %432 = vmatmul.mubr.bf16.gmra.mrb[0].mxu0 %v394
        %v433 = vpop.f32.mrb[0].mxu0
        %v434 = vadd.f32 0.0, %v433
        %v435 = vpop.f32.mrb[0].mxu0
        %v436 = vpop.f32.mrb[0].mxu0
        %v437 = vpop.f32.mrb[0].mxu0
        %438 = vdwg.mxu0
        %v439 = vadd.f32 %v274, %v434
        %440 = vrot.lane.b32.xlu0 %v276, 120
        %v441 = vpop.permute.xlu0 %440
        %442 = vrot.lane.b32.xlu0 %v276, 88
        %v443 = vpop.permute.xlu0 %442
        %v445 = vsel %vm280, %v441, 0
        %v448 = vsel %vm280, %v443, 0
        %450 = vmatprep.subr.bf16.mxu0 0
        %451 = vmatpush1.bf16.xpose.msra.mxu0 %v448
        %452 = vmatprep.subr.bf16.mxu0 0
        %453 = vmatpush1.bf16.xpose.msra.mxu0 0
        %454 = vmatprep.subr.bf16.mxu0 0
        %455 = vmatpush1.bf16.xpose.msra.mxu0 0
        %456 = vmatprep.subr.bf16.mxu0 0
        %457 = vmatpush1.bf16.xpose.msra.mxu0 0
        %458 = vmatprep.subr.bf16.mxu0 0
        %459 = vmatpush1.bf16.xpose.msra.mxu0 0
        %460 = vmatprep.subr.bf16.mxu0 0
        %461 = vmatpush1.bf16.xpose.msra.mxu0 0
        %462 = vmatprep.subr.bf16.mxu0 0
        %463 = vmatpush1.bf16.xpose.msra.mxu0 0
        %464 = vmatprep.subr.bf16.mxu0 0
        %465 = vmatpush1.bf16.xpose.msra.mxu0 0
        %466 = vmatprep.subr.bf16.mxu0 0
        %467 = vmatpush1.bf16.xpose.msra.mxu0 0
        %468 = vmatprep.subr.bf16.mxu0 0
        %469 = vmatpush1.bf16.xpose.msra.mxu0 0
        %470 = vmatprep.subr.bf16.mxu0 0
        %471 = vmatpush1.bf16.xpose.msra.mxu0 0
        %472 = vmatprep.subr.bf16.mxu0 0
        %473 = vmatpush1.bf16.xpose.msra.mxu0 0
        %474 = vmatprep.subr.bf16.mxu0 0
        %475 = vmatpush1.bf16.xpose.msra.mxu0 0
        %476 = vmatprep.subr.bf16.mxu0 0
        %477 = vmatpush1.bf16.xpose.msra.mxu0 0
        %478 = vmatprep.subr.bf16.mxu0 0
        %479 = vmatpush1.bf16.xpose.msra.mxu0 0
        %480 = vmatprep.subr.bf16.mxu0 0
        %481 = vmatpush1.bf16.xpose.msra.mxu0 0
        %482 = vmatprep.mubr.bf16.mxu0 0
        %483 = vmatmul.mubr.bf16.gmra.mrb[0].mxu0 %v445
        %v484 = vpop.f32.mrb[0].mxu0
        %v485 = vadd.f32 0.0, %v484
        %v486 = vpop.f32.mrb[0].mxu0
        %v487 = vpop.f32.mrb[0].mxu0
        %v488 = vpop.f32.mrb[0].mxu0
        %489 = vdwg.mxu0
        %v490 = vsel %vm268, %v485, -1e+30
        %v491 = vsel %vm280, %v490, -inf
        %492 = vmax.xlane.f32.xlu0 %v491
        %v493 = vpop.xlane.xlu0 %492
        %v494 = vsub.f32 %v490, %v493
        %v495 = vmul.f32 %v494, 1.442695
        %v496 = vpow.pop %v495
        %v497 = vsel %vm280, %v496, 0.0
        %498 = vadd.xlane.f32.xlu0 %v497
        %v499 = vpop.xlane.xlu0 %498
        %v500 = vpack.c.bf16 %v496, %v496
        %501 = vrot.lane.b32.xlu0 %v276, 56
        %v502 = vpop.permute.xlu0 %501
        %v504 = vsel %vm280, %v500, 0
        %v507 = vsel %vm343, %v502, 0
        %509 = vmatprep.subr.bf16.mxu0 0
        %510 = vmatpush1.bf16.msra.mxu0 %v507
        %511 = vmatprep.subr.bf16.mxu0 0
        %512 = vmatpush1.bf16.msra.mxu0 0
        %513 = vmatprep.subr.bf16.mxu0 0
        %514 = vmatpush1.bf16.msra.mxu0 0
        %515 = vmatprep.subr.bf16.mxu0 0
        %516 = vmatpush1.bf16.msra.mxu0 0
        %517 = vmatprep.subr.bf16.mxu0 0
        %518 = vmatpush1.bf16.msra.mxu0 0
        %519 = vmatprep.subr.bf16.mxu0 0
        %520 = vmatpush1.bf16.msra.mxu0 0
        %521 = vmatprep.subr.bf16.mxu0 0
        %522 = vmatpush1.bf16.msra.mxu0 0
        %523 = vmatprep.subr.bf16.mxu0 0
        %524 = vmatpush1.bf16.msra.mxu0 0
        %525 = vmatprep.subr.bf16.mxu0 0
        %526 = vmatpush1.bf16.msra.mxu0 0
        %527 = vmatprep.subr.bf16.mxu0 0
        %528 = vmatpush1.bf16.msra.mxu0 0
        %529 = vmatprep.subr.bf16.mxu0 0
        %530 = vmatpush1.bf16.msra.mxu0 0
        %531 = vmatprep.subr.bf16.mxu0 0
        %532 = vmatpush1.bf16.msra.mxu0 0
        %533 = vmatprep.subr.bf16.mxu0 0
        %534 = vmatpush1.bf16.msra.mxu0 0
        %535 = vmatprep.subr.bf16.mxu0 0
        %536 = vmatpush1.bf16.msra.mxu0 0
        %537 = vmatprep.subr.bf16.mxu0 0
        %538 = vmatpush1.bf16.msra.mxu0 0
        %539 = vmatprep.subr.bf16.mxu0 0
        %540 = vmatpush1.bf16.msra.mxu0 0
        %541 = vmatprep.mubr.bf16.mxu0 0
        %542 = vmatmul.mubr.bf16.gmra.mrb[0].mxu0 %v504
        %v543 = vpop.f32.mrb[0].mxu0
        %v544 = vadd.f32 0.0, %v543
        %v545 = vpop.f32.mrb[0].mxu0
        %v546 = vpop.f32.mrb[0].mxu0
        %v547 = vpop.f32.mrb[0].mxu0
        %548 = vdwg.mxu0
        %v549 = vrcp.pop %v499
        %v550 = vmul.f32 %v544, %v549
        %v551 = vpack.c.bf16 %v550, %v550
        %v552 = vpack.c.b16 %v213, %v213
        %553 = vrot.lane.b32.xlu0 %v552, 32
        %v554 = vpop.permute.xlu0 %553
        %v556 = vsel %vm280, %v551, 0
        %v559 = vsel %vm343, %v554, 0
        %561 = vmatprep.subr.bf16.mxu0 0
        %562 = vmatpush1.bf16.msra.mxu0 %v559
        %563 = vmatprep.subr.bf16.mxu0 0
        %564 = vmatpush1.bf16.msra.mxu0 0
        %565 = vmatprep.subr.bf16.mxu0 0
        %566 = vmatpush1.bf16.msra.mxu0 0
        %567 = vmatprep.subr.bf16.mxu0 0
        %568 = vmatpush1.bf16.msra.mxu0 0
        %569 = vmatprep.subr.bf16.mxu0 0
        %570 = vmatpush1.bf16.msra.mxu0 0
        %571 = vmatprep.subr.bf16.mxu0 0
        %572 = vmatpush1.bf16.msra.mxu0 0
        %573 = vmatprep.subr.bf16.mxu0 0
        %574 = vmatpush1.bf16.msra.mxu0 0
        %575 = vmatprep.subr.bf16.mxu0 0
        %576 = vmatpush1.bf16.msra.mxu0 0
        %577 = vmatprep.subr.bf16.mxu0 0
        %578 = vmatpush1.bf16.msra.mxu0 0
        %579 = vmatprep.subr.bf16.mxu0 0
        %580 = vmatpush1.bf16.msra.mxu0 0
        %581 = vmatprep.subr.bf16.mxu0 0
        %582 = vmatpush1.bf16.msra.mxu0 0
        %583 = vmatprep.subr.bf16.mxu0 0
        %584 = vmatpush1.bf16.msra.mxu0 0
        %585 = vmatprep.subr.bf16.mxu0 0
        %586 = vmatpush1.bf16.msra.mxu0 0
        %587 = vmatprep.subr.bf16.mxu0 0
        %588 = vmatpush1.bf16.msra.mxu0 0
        %589 = vmatprep.subr.bf16.mxu0 0
        %590 = vmatpush1.bf16.msra.mxu0 0
        %591 = vmatprep.subr.bf16.mxu0 0
        %592 = vmatpush1.bf16.msra.mxu0 0
        %593 = vmatprep.mubr.bf16.mxu0 0
        %594 = vmatmul.mubr.bf16.gmra.mrb[0].mxu0 %v556
        %v595 = vpop.f32.mrb[0].mxu0
        %v596 = vadd.f32 0.0, %v595
        %v597 = vpop.f32.mrb[0].mxu0
        %v598 = vpop.f32.mrb[0].mxu0
        %v599 = vpop.f32.mrb[0].mxu0
        %600 = vdwg.mxu0
        %v601 = vadd.f32 %v439, %v596
        %602 = vrot.lane.b32.xlu0 %v276, 112
        %v603 = vpop.permute.xlu0 %602
        %604 = vrot.lane.b32.xlu0 %v276, 80
        %v605 = vpop.permute.xlu0 %604
        %v607 = vsel %vm280, %v603, 0
        %v610 = vsel %vm280, %v605, 0
        %612 = vmatprep.subr.bf16.mxu0 0
        %613 = vmatpush1.bf16.xpose.msra.mxu0 %v610
        %614 = vmatprep.subr.bf16.mxu0 0
        %615 = vmatpush1.bf16.xpose.msra.mxu0 0
        %616 = vmatprep.subr.bf16.mxu0 0
        %617 = vmatpush1.bf16.xpose.msra.mxu0 0
        %618 = vmatprep.subr.bf16.mxu0 0
        %619 = vmatpush1.bf16.xpose.msra.mxu0 0
        %620 = vmatprep.subr.bf16.mxu0 0
        %621 = vmatpush1.bf16.xpose.msra.mxu0 0
        %622 = vmatprep.subr.bf16.mxu0 0
        %623 = vmatpush1.bf16.xpose.msra.mxu0 0
        %624 = vmatprep.subr.bf16.mxu0 0
        %625 = vmatpush1.bf16.xpose.msra.mxu0 0
        %626 = vmatprep.subr.bf16.mxu0 0
        %627 = vmatpush1.bf16.xpose.msra.mxu0 0
        %628 = vmatprep.subr.bf16.mxu0 0
        %629 = vmatpush1.bf16.xpose.msra.mxu0 0
        %630 = vmatprep.subr.bf16.mxu0 0
        %631 = vmatpush1.bf16.xpose.msra.mxu0 0
        %632 = vmatprep.subr.bf16.mxu0 0
        %633 = vmatpush1.bf16.xpose.msra.mxu0 0
        %634 = vmatprep.subr.bf16.mxu0 0
        %635 = vmatpush1.bf16.xpose.msra.mxu0 0
        %636 = vmatprep.subr.bf16.mxu0 0
        %637 = vmatpush1.bf16.xpose.msra.mxu0 0
        %638 = vmatprep.subr.bf16.mxu0 0
        %639 = vmatpush1.bf16.xpose.msra.mxu0 0
        %640 = vmatprep.subr.bf16.mxu0 0
        %641 = vmatpush1.bf16.xpose.msra.mxu0 0
        %642 = vmatprep.subr.bf16.mxu0 0
        %643 = vmatpush1.bf16.xpose.msra.mxu0 0
        %644 = vmatprep.mubr.bf16.mxu0 0
        %645 = vmatmul.mubr.bf16.gmra.mrb[0].mxu0 %v607
        %v646 = vpop.f32.mrb[0].mxu0
        %v647 = vadd.f32 0.0, %v646
        %v648 = vpop.f32.mrb[0].mxu0
        %v649 = vpop.f32.mrb[0].mxu0
        %v650 = vpop.f32.mrb[0].mxu0
        %651 = vdwg.mxu0
        %v652 = vsel %vm268, %v647, -1e+30
        %v653 = vsel %vm280, %v652, -inf
        %654 = vmax.xlane.f32.xlu0 %v653
        %v655 = vpop.xlane.xlu0 %654
        %v656 = vsub.f32 %v652, %v655
        %v657 = vmul.f32 %v656, 1.442695
        %v658 = vpow.pop %v657
        %v659 = vsel %vm280, %v658, 0.0
        %660 = vadd.xlane.f32.xlu0 %v659
        %v661 = vpop.xlane.xlu0 %660
        %v662 = vpack.c.bf16 %v658, %v658
        %663 = vrot.lane.b32.xlu0 %v276, 48
        %v664 = vpop.permute.xlu0 %663
        %v666 = vsel %vm280, %v662, 0
        %v669 = vsel %vm343, %v664, 0
        %671 = vmatprep.subr.bf16.mxu0 0
        %672 = vmatpush1.bf16.msra.mxu0 %v669
        %673 = vmatprep.subr.bf16.mxu0 0
        %674 = vmatpush1.bf16.msra.mxu0 0
        %675 = vmatprep.subr.bf16.mxu0 0
        %676 = vmatpush1.bf16.msra.mxu0 0
        %677 = vmatprep.subr.bf16.mxu0 0
        %678 = vmatpush1.bf16.msra.mxu0 0
        %679 = vmatprep.subr.bf16.mxu0 0
        %680 = vmatpush1.bf16.msra.mxu0 0
        %681 = vmatprep.subr.bf16.mxu0 0
        %682 = vmatpush1.bf16.msra.mxu0 0
        %683 = vmatprep.subr.bf16.mxu0 0
        %684 = vmatpush1.bf16.msra.mxu0 0
        %685 = vmatprep.subr.bf16.mxu0 0
        %686 = vmatpush1.bf16.msra.mxu0 0
        %687 = vmatprep.subr.bf16.mxu0 0
        %688 = vmatpush1.bf16.msra.mxu0 0
        %689 = vmatprep.subr.bf16.mxu0 0
        %690 = vmatpush1.bf16.msra.mxu0 0
        %691 = vmatprep.subr.bf16.mxu0 0
        %692 = vmatpush1.bf16.msra.mxu0 0
        %693 = vmatprep.subr.bf16.mxu0 0
        %694 = vmatpush1.bf16.msra.mxu0 0
        %695 = vmatprep.subr.bf16.mxu0 0
        %696 = vmatpush1.bf16.msra.mxu0 0
        %697 = vmatprep.subr.bf16.mxu0 0
        %698 = vmatpush1.bf16.msra.mxu0 0
        %699 = vmatprep.subr.bf16.mxu0 0
        %700 = vmatpush1.bf16.msra.mxu0 0
        %701 = vmatprep.subr.bf16.mxu0 0
        %702 = vmatpush1.bf16.msra.mxu0 0
        %703 = vmatprep.mubr.bf16.mxu0 0
        %704 = vmatmul.mubr.bf16.gmra.mrb[0].mxu0 %v666
        %v705 = vpop.f32.mrb[0].mxu0
        %v706 = vadd.f32 0.0, %v705
        %v707 = vpop.f32.mrb[0].mxu0
        %v708 = vpop.f32.mrb[0].mxu0
        %v709 = vpop.f32.mrb[0].mxu0
        %710 = vdwg.mxu0
        %v711 = vrcp.pop %v661
        %v712 = vmul.f32 %v706, %v711
        %v713 = vpack.c.bf16 %v712, %v712
        %v714 = vpack.c.b16 %v214, %v214
        %715 = vrot.lane.b32.xlu0 %v714, 32
        %v716 = vpop.permute.xlu0 %715
        %v718 = vsel %vm280, %v713, 0
        %v721 = vsel %vm343, %v716, 0
        %723 = vmatprep.subr.bf16.mxu0 0
        %724 = vmatpush1.bf16.msra.mxu0 %v721
        %725 = vmatprep.subr.bf16.mxu0 0
        %726 = vmatpush1.bf16.msra.mxu0 0
        %727 = vmatprep.subr.bf16.mxu0 0
        %728 = vmatpush1.bf16.msra.mxu0 0
        %729 = vmatprep.subr.bf16.mxu0 0
        %730 = vmatpush1.bf16.msra.mxu0 0
        %731 = vmatprep.subr.bf16.mxu0 0
        %732 = vmatpush1.bf16.msra.mxu0 0
        %733 = vmatprep.subr.bf16.mxu0 0
        %734 = vmatpush1.bf16.msra.mxu0 0
        %735 = vmatprep.subr.bf16.mxu0 0
        %736 = vmatpush1.bf16.msra.mxu0 0
        %737 = vmatprep.subr.bf16.mxu0 0
        %738 = vmatpush1.bf16.msra.mxu0 0
        %739 = vmatprep.subr.bf16.mxu0 0
        %740 = vmatpush1.bf16.msra.mxu0 0
        %741 = vmatprep.subr.bf16.mxu0 0
        %742 = vmatpush1.bf16.msra.mxu0 0
        %743 = vmatprep.subr.bf16.mxu0 0
        %744 = vmatpush1.bf16.msra.mxu0 0
        %745 = vmatprep.subr.bf16.mxu0 0
        %746 = vmatpush1.bf16.msra.mxu0 0
        %747 = vmatprep.subr.bf16.mxu0 0
        %748 = vmatpush1.bf16.msra.mxu0 0
        %749 = vmatprep.subr.bf16.mxu0 0
        %750 = vmatpush1.bf16.msra.mxu0 0
        %751 = vmatprep.subr.bf16.mxu0 0
        %752 = vmatpush1.bf16.msra.mxu0 0
        %753 = vmatprep.subr.bf16.mxu0 0
        %754 = vmatpush1.bf16.msra.mxu0 0
        %755 = vmatprep.mubr.bf16.mxu0 0
        %756 = vmatmul.mubr.bf16.gmra.mrb[0].mxu0 %v718
        %v757 = vpop.f32.mrb[0].mxu0
        %v758 = vadd.f32 0.0, %v757
        %v759 = vpop.f32.mrb[0].mxu0
        %v760 = vpop.f32.mrb[0].mxu0
        %v761 = vpop.f32.mrb[0].mxu0
        %762 = vdwg.mxu0
        %v763 = vadd.f32 %v601, %v758
        %764 = vrot.lane.b32.xlu0 %v276, 104
        %v765 = vpop.permute.xlu0 %764
        %766 = vrot.lane.b32.xlu0 %v276, 72
        %v767 = vpop.permute.xlu0 %766
        %v769 = vsel %vm280, %v765, 0
        %v772 = vsel %vm280, %v767, 0
        %774 = vmatprep.subr.bf16.mxu0 0
        %775 = vmatpush1.bf16.xpose.msra.mxu0 %v772
        %776 = vmatprep.subr.bf16.mxu0 0
        %777 = vmatpush1.bf16.xpose.msra.mxu0 0
        %778 = vmatprep.subr.bf16.mxu0 0
        %779 = vmatpush1.bf16.xpose.msra.mxu0 0
        %780 = vmatprep.subr.bf16.mxu0 0
        %781 = vmatpush1.bf16.xpose.msra.mxu0 0
        %782 = vmatprep.subr.bf16.mxu0 0
        %783 = vmatpush1.bf16.xpose.msra.mxu0 0
        %784 = vmatprep.subr.bf16.mxu0 0
        %785 = vmatpush1.bf16.xpose.msra.mxu0 0
        %786 = vmatprep.subr.bf16.mxu0 0
        %787 = vmatpush1.bf16.xpose.msra.mxu0 0
        %788 = vmatprep.subr.bf16.mxu0 0
        %789 = vmatpush1.bf16.xpose.msra.mxu0 0
        %790 = vmatprep.subr.bf16.mxu0 0
        %791 = vmatpush1.bf16.xpose.msra.mxu0 0
        %792 = vmatprep.subr.bf16.mxu0 0
        %793 = vmatpush1.bf16.xpose.msra.mxu0 0
        %794 = vmatprep.subr.bf16.mxu0 0
        %795 = vmatpush1.bf16.xpose.msra.mxu0 0
        %796 = vmatprep.subr.bf16.mxu0 0
        %797 = vmatpush1.bf16.xpose.msra.mxu0 0
        %798 = vmatprep.subr.bf16.mxu0 0
        %799 = vmatpush1.bf16.xpose.msra.mxu0 0
        %800 = vmatprep.subr.bf16.mxu0 0
        %801 = vmatpush1.bf16.xpose.msra.mxu0 0
        %802 = vmatprep.subr.bf16.mxu0 0
        %803 = vmatpush1.bf16.xpose.msra.mxu0 0
        %804 = vmatprep.subr.bf16.mxu0 0
        %805 = vmatpush1.bf16.xpose.msra.mxu0 0
        %806 = vmatprep.mubr.bf16.mxu0 0
        %807 = vmatmul.mubr.bf16.gmra.mrb[0].mxu0 %v769
        %v808 = vpop.f32.mrb[0].mxu0
        %v809 = vadd.f32 0.0, %v808
        %v810 = vpop.f32.mrb[0].mxu0
        %v811 = vpop.f32.mrb[0].mxu0
        %v812 = vpop.f32.mrb[0].mxu0
        %813 = vdwg.mxu0
        %v814 = vsel %vm268, %v809, -1e+30
        %v815 = vsel %vm280, %v814, -inf
        %816 = vmax.xlane.f32.xlu0 %v815
        %v817 = vpop.xlane.xlu0 %816
        %v818 = vsub.f32 %v814, %v817
        %v819 = vmul.f32 %v818, 1.442695
        %v820 = vpow.pop %v819
        %v821 = vsel %vm280, %v820, 0.0
        %822 = vadd.xlane.f32.xlu0 %v821
        %v823 = vpop.xlane.xlu0 %822
        %v824 = vpack.c.bf16 %v820, %v820
        %825 = vrot.lane.b32.xlu0 %v276, 40
        %v826 = vpop.permute.xlu0 %825
        %v828 = vsel %vm280, %v824, 0
        %v831 = vsel %vm343, %v826, 0
        %833 = vmatprep.subr.bf16.mxu0 0
        %834 = vmatpush1.bf16.msra.mxu0 %v831
        %835 = vmatprep.subr.bf16.mxu0 0
        %836 = vmatpush1.bf16.msra.mxu0 0
        %837 = vmatprep.subr.bf16.mxu0 0
        %838 = vmatpush1.bf16.msra.mxu0 0
        %839 = vmatprep.subr.bf16.mxu0 0
        %840 = vmatpush1.bf16.msra.mxu0 0
        %841 = vmatprep.subr.bf16.mxu0 0
        %842 = vmatpush1.bf16.msra.mxu0 0
        %843 = vmatprep.subr.bf16.mxu0 0
        %844 = vmatpush1.bf16.msra.mxu0 0
        %845 = vmatprep.subr.bf16.mxu0 0
        %846 = vmatpush1.bf16.msra.mxu0 0
        %847 = vmatprep.subr.bf16.mxu0 0
        %848 = vmatpush1.bf16.msra.mxu0 0
        %849 = vmatprep.subr.bf16.mxu0 0
        %850 = vmatpush1.bf16.msra.mxu0 0
        %851 = vmatprep.subr.bf16.mxu0 0
        %852 = vmatpush1.bf16.msra.mxu0 0
        %853 = vmatprep.subr.bf16.mxu0 0
        %854 = vmatpush1.bf16.msra.mxu0 0
        %855 = vmatprep.subr.bf16.mxu0 0
        %856 = vmatpush1.bf16.msra.mxu0 0
        %857 = vmatprep.subr.bf16.mxu0 0
        %858 = vmatpush1.bf16.msra.mxu0 0
        %859 = vmatprep.subr.bf16.mxu0 0
        %860 = vmatpush1.bf16.msra.mxu0 0
        %861 = vmatprep.subr.bf16.mxu0 0
        %862 = vmatpush1.bf16.msra.mxu0 0
        %863 = vmatprep.subr.bf16.mxu0 0
        %864 = vmatpush1.bf16.msra.mxu0 0
        %865 = vmatprep.mubr.bf16.mxu0 0
        %866 = vmatmul.mubr.bf16.gmra.mrb[0].mxu0 %v828
        %v867 = vpop.f32.mrb[0].mxu0
        %v868 = vadd.f32 0.0, %v867
        %v869 = vpop.f32.mrb[0].mxu0
        %v870 = vpop.f32.mrb[0].mxu0
        %v871 = vpop.f32.mrb[0].mxu0
        %872 = vdwg.mxu0
        %v873 = vrcp.pop %v823
        %v874 = vmul.f32 %v868, %v873
        %v875 = vpack.c.bf16 %v874, %v874
        %v876 = vpack.c.b16 %v215, %v215
        %877 = vrot.lane.b32.xlu0 %v876, 32
        %v878 = vpop.permute.xlu0 %877
        %v880 = vsel %vm280, %v875, 0
        %v883 = vsel %vm343, %v878, 0
        %885 = vmatprep.subr.bf16.mxu0 0
        %886 = vmatpush1.bf16.msra.mxu0 %v883
        %887 = vmatprep.subr.bf16.mxu0 0
        %888 = vmatpush1.bf16.msra.mxu0 0
        %889 = vmatprep.subr.bf16.mxu0 0
        %890 = vmatpush1.bf16.msra.mxu0 0
        %891 = vmatprep.subr.bf16.mxu0 0
        %892 = vmatpush1.bf16.msra.mxu0 0
        %893 = vmatprep.subr.bf16.mxu0 0
        %894 = vmatpush1.bf16.msra.mxu0 0
        %895 = vmatprep.subr.bf16.mxu0 0
        %896 = vmatpush1.bf16.msra.mxu0 0
        %897 = vmatprep.subr.bf16.mxu0 0
        %898 = vmatpush1.bf16.msra.mxu0 0
        %899 = vmatprep.subr.bf16.mxu0 0
        %900 = vmatpush1.bf16.msra.mxu0 0
        %901 = vmatprep.subr.bf16.mxu0 0
        %902 = vmatpush1.bf16.msra.mxu0 0
        %903 = vmatprep.subr.bf16.mxu0 0
        %904 = vmatpush1.bf16.msra.mxu0 0
        %905 = vmatprep.subr.bf16.mxu0 0
        %906 = vmatpush1.bf16.msra.mxu0 0
        %907 = vmatprep.subr.bf16.mxu0 0
        %908 = vmatpush1.bf16.msra.mxu0 0
        %909 = vmatprep.subr.bf16.mxu0 0
        %910 = vmatpush1.bf16.msra.mxu0 0
        %911 = vmatprep.subr.bf16.mxu0 0
        %912 = vmatpush1.bf16.msra.mxu0 0
        %913 = vmatprep.subr.bf16.mxu0 0
        %914 = vmatpush1.bf16.msra.mxu0 0
        %915 = vmatprep.subr.bf16.mxu0 0
        %916 = vmatpush1.bf16.msra.mxu0 0
        %917 = vmatprep.mubr.bf16.mxu0 0
        %918 = vmatmul.mubr.bf16.gmra.mrb[0].mxu0 %v880
        %v919 = vpop.f32.mrb[0].mxu0
        %v920 = vadd.f32 0.0, %v919
        %v921 = vpop.f32.mrb[0].mxu0
        %v922 = vpop.f32.mrb[0].mxu0
        %v923 = vpop.f32.mrb[0].mxu0
        %924 = vdwg.mxu0
        %v925 = vadd.f32 %v763, %v920
        %926 = vst.msk [vmem:[%s200] sm:$0xff] %vm220, %v925
        %s927 = sand.u32 %s97, 1
        %s928 = scalar_lea.sflag [#allocation4], %s927
        %s929 = sand.u32 %s97, 1
        %s930 = smul.addr %s929, 8
        %s931 = scalar_lea.vmem [#allocation7], %s930
        // Predicated region
        $region41: #{tpu_custom_call.1} parent=31 // pred_check
          %p932 = pneg %p107
        $region42: #{tpu_custom_call.1} parent=31 // pred_check_branch
          %934 = sbr.rel (%p932) target = $region44
        $region43: #{tpu_custom_call.1} parent=31 // pred_region
          %s936 = ssub.s32 128, 128
          %937 = vsyncadd %s928, %s936
          %s938 = smul.addr %s21, 128
          %s939 = scalar_lea.hbm %s3, %s938
          %s941 = sshll.u32 %s931, 4
          %s942 = int_to_ptr.vmem [resolvable:$true] %s941
          %944 = dma.vmem_to_hbm [thread:$0]  %s942, 128, %s939, %s928
        $region44: #{tpu_custom_call.1} parent=31 // pred_fallthru
          _
      $region32: #{tpu_custom_call.1} parent=5 // pred_fallthru
        _
      %p945 = scmp.le.s32.totalorder 2, %s16
      // Predicated region
      $region45: #{tpu_custom_call.1} parent=5 // pred_check
        %p946 = pneg %p945
      $region46: #{tpu_custom_call.1} parent=5 // pred_check_branch
        %948 = sbr.rel (%p946) target = $region48
      $region47: #{tpu_custom_call.1} parent=5 // pred_region
        %s949 = ssub.s32 %s16, 2
        // Predicated region
        $region49: #{tpu_custom_call.1} parent=47 // pred_check
          %p950 = pneg %p113
        $region50: #{tpu_custom_call.1} parent=47 // pred_check_branch
          %952 = sbr.rel (%p950) target = $region52
        $region51: #{tpu_custom_call.1} parent=47 // pred_region
          %s953 = sand.u32 %s98, 1
          %s954 = scalar_lea.sflag [#allocation4], %s953
          %s955 = sand.u32 %s98, 1
          %s956 = smul.addr %s955, 8
          %s957 = scalar_lea.vmem [#allocation7], %s956
          %958 = dma.done %s954, 128
        $region52: #{tpu_custom_call.1} parent=47 // pred_fallthru
          _
      $region48: #{tpu_custom_call.1} parent=5 // pred_fallthru
        _
    $region6: #{tpu_custom_call.1} parent=1 // loop_footer
      %s20 = sadd.s32 1, %s16
    $region7: #{tpu_custom_call.1} parent=1 // loop_footer_branch
      %15 = sbr.rel target = $region3
    $region8: #{tpu_custom_call.1} parent=1 // loop_exit
      _
    %959 = vsyncpa [#allocation3], 1
    %s960 = scalar_lea.sflag [#allocation3], 1
    %961 = vsyncpa %s960, 1
    %962 = vsyncpa [#allocation6], 1
    %963 = vsyncpa [#allocation4], 1
    %s964 = scalar_lea.sflag [#allocation4], 1
    %965 = vsyncpa %s964, 1

</llo_original>
